<compile_context>
chip_gen: v5e
topology: v5e:2x2
jax: 0.10.0
libtpu: 0.0.40
codegen_flags: <defaults>
</compile_context>

<pallas_src>
import math

import jax
import jax.numpy as jnp
from jax.experimental import pallas as pl
from jax.experimental.pallas import tpu as pltpu

STATE_SIZE = 12 * 4   # 48
HIDDEN = 128
ACTION_SIZE = 1
LANES = 128


def _round_up(x, m):
    return ((x + m - 1) // m) * m


def actor_kernel(x_ref, w1_ref, b1_ref, w2_ref, b2_ref, w3_ref, b3_ref, o_ref):
    # x: (TM, 48) f32/bf16 -> bf16 for the MXU; accumulate in f32.
    x = x_ref[...].astype(jnp.bfloat16)
    h1 = jnp.dot(x, w1_ref[...], preferred_element_type=jnp.float32)
    h1 = jnp.maximum(h1 + b1_ref[...], 0.0)                      # (TM, 128) f32
    h2 = jnp.dot(h1.astype(jnp.bfloat16), w2_ref[...],
                 preferred_element_type=jnp.float32)
    h2 = jnp.maximum(h2 + b2_ref[...], 0.0)                      # (TM, 128) f32
    # mu: 128 -> 1 projection on the VPU (elementwise mul) + XLU reduce,
    # reduced directly into the blocked (TM/128, 128) output layout so the
    # lane-dense store needs no extra relayout.  mu's bias is an SMEM scalar.
    rows, lanes = o_ref.shape
    s = (h2 * w3_ref[...]).reshape(rows, lanes, HIDDEN).sum(axis=-1)
    o_ref[...] = jnp.tanh(s + b3_ref[0])


def _choose_tm(batch, tm_max):
    """Batch tile: as large as possible (amortize the fixed per-step pipeline
    overhead), but guarantee >=2 grid steps when there are >=2 lane-tiles of
    rows so v7x's two TensorCores both get work."""
    b128 = _round_up(max(batch, 1), LANES)
    tm = min(_round_up(max(tm_max, LANES), LANES), b128)
    if b128 >= 2 * LANES and b128 <= tm:        # would collapse to grid=(1,)
        tm = _round_up((b128 + 1) // 2, LANES)  # split roughly in half
    return tm


def _vmem_limit_bytes(tm, x_itemsize):
    """Right-sized VMEM limit for the chosen tile (with headroom)."""
    x_buf = 2 * tm * LANES * x_itemsize               # lane-padded, double-buffered
    acts = 2 * tm * HIDDEN * 4                        # h1 + h2 f32 temps
    out_buf = 2 * (tm // LANES) * LANES * 4           # double-buffered output block
    weights = ((STATE_SIZE * HIDDEN + HIDDEN * HIDDEN) * 2   # w1, w2 bf16
               + 3 * 8 * HIDDEN * 4)                         # b1, b2, w3 f32 (sublane-padded)
    total = x_buf + acts + out_buf + weights
    return int(min(max(total * 3 // 2 + (2 << 20), 4 << 20), 64 << 20))


def actor_forward(state, params, *, tm=4096):
    """state: (B, STATE_SIZE) f32 or bf16. Returns (B, ACTION_SIZE) f32."""
    B = state.shape[0]
    tm = _choose_tm(B, tm)
    b_pad = _round_up(B, tm)
    num_tiles = b_pad // tm
    if b_pad != B:
        state = jnp.pad(state, ((0, b_pad - B), (0, 0)))

    w1, b1 = params["w1"], params["b1"]
    w2, b2 = params["w2"], params["b2"]
    w3, b3 = params["w3"], params["b3"]

    # Constant index_map -> weights/biases stay VMEM-resident across grid steps.
    const = lambda shape: pl.BlockSpec(shape, lambda i: (0,) * len(shape))

    out2d = pl.pallas_call(
        actor_kernel,
        out_shape=jax.ShapeDtypeStruct((b_pad // LANES, LANES), jnp.float32),
        grid_spec=pltpu.PrefetchScalarGridSpec(
            num_scalar_prefetch=0,
            grid=(num_tiles,),
            in_specs=[
                # x tile; bump to pipeline_mode=pl.Buffered(3) only if a trace
                # at large tm shows exposed x DMA.
                pl.BlockSpec((tm, STATE_SIZE), lambda i: (i, 0)),
                const(w1.shape), const(b1.shape),                    # fc1 (resident)
                const(w2.shape), const(b2.shape),                    # fc2 (resident)
                const(w3.shape),                                     # mu weight row
                pl.BlockSpec(memory_space=pltpu.MemorySpace.SMEM),   # mu bias scalar
            ],
            out_specs=pl.BlockSpec((tm // LANES, LANES), lambda i: (i, 0)),
        ),
        compiler_params=pltpu.CompilerParams(
            dimension_semantics=("parallel",),       # 2-TC split on v7x
            vmem_limit_bytes=_vmem_limit_bytes(tm, state.dtype.itemsize),
        ),
    )(state, w1, b1, w2, b2, w3, b3)

    return out2d.reshape(b_pad, 1)[:B]


def init_params(key):
    """torch.nn.Linear default init: U(-1/sqrt(fan_in), 1/sqrt(fan_in)).
    fc1/fc2 weights stored (in, out) in bf16 (MXU inputs); mu weight stored as
    an f32 (1, 128) row (VPU path); biases f32."""
    def uniform(k, shape, fan_in):
        bound = 1.0 / math.sqrt(fan_in)
        return jax.random.uniform(k, shape, jnp.float32, -bound, bound)

    k = jax.random.split(key, 6)
    w1 = uniform(k[0], (STATE_SIZE, HIDDEN), STATE_SIZE)
    b1 = uniform(k[1], (1, HIDDEN), STATE_SIZE)
    w2 = uniform(k[2], (HIDDEN, HIDDEN), HIDDEN)
    b2 = uniform(k[3], (1, HIDDEN), HIDDEN)
    w3 = uniform(k[4], (1, HIDDEN), HIDDEN)        # mu weight as a lane row
    b3 = uniform(k[5], (1,), HIDDEN)               # mu bias scalar (SMEM)
    return dict(w1=w1.astype(jnp.bfloat16), b1=b1,
                w2=w2.astype(jnp.bfloat16), b2=b2,
                w3=w3, b3=b3)


def reference_forward(state, params):
    """Pure-JAX f32 reference (weights de-quantized from bf16)."""
    w1 = params["w1"].astype(jnp.float32)
    w2 = params["w2"].astype(jnp.float32)
    h1 = jnp.maximum(state.astype(jnp.float32) @ w1 + params["b1"], 0.0)
    h2 = jnp.maximum(h1 @ w2 + params["b2"], 0.0)
    return jnp.tanh(h2 @ params["w3"].T + params["b3"][None, :])


if __name__ == "__main__":
    key = jax.random.PRNGKey(0)
    k_params, k_state = jax.random.split(key)

    params = init_params(k_params)
    batch = 2   # tiny demo batch; kernel tiles/pads internally to a 128-row tile
    state = jax.random.normal(k_state, (batch, STATE_SIZE), jnp.float32)

    out = jax.block_until_ready(actor_forward(state, params))
    ref = reference_forward(state, params)

    assert out.shape == (batch, ACTION_SIZE), out.shape
    assert bool(jnp.all(jnp.isfinite(out)))
    # bf16 MXU inputs (f32 accumulation) vs f32 reference math -> loose tolerance.
    assert jnp.allclose(out, ref, atol=5e-2, rtol=5e-2), (out, ref)

    # Also exercise a multi-tile batch so the >=2-grid-step path is covered.
    big = jax.random.normal(jax.random.PRNGKey(1), (3000, STATE_SIZE), jnp.float32)
    out_big = jax.block_until_ready(actor_forward(big, params))
    assert out_big.shape == (3000, ACTION_SIZE)
    assert jnp.allclose(out_big, reference_forward(big, params), atol=5e-2, rtol=5e-2)

    print("KERNEL_OK")
</pallas_src>

<mosaic_0001>
module attributes {stable_mosaic.version = 11 : i64} {
  func.func @actor_kernel(%arg0: i32, %arg1: memref<128x48xf32, #tpu.memory_space<vmem>>, %arg2: memref<48x128xbf16, #tpu.memory_space<vmem>>, %arg3: memref<1x128xf32, #tpu.memory_space<vmem>>, %arg4: memref<128x128xbf16, #tpu.memory_space<vmem>>, %arg5: memref<1x128xf32, #tpu.memory_space<vmem>>, %arg6: memref<1x128xf32, #tpu.memory_space<vmem>>, %arg7: memref<1xf32, #tpu.memory_space<smem>>, %arg8: memref<1x128xf32, #tpu.memory_space<vmem>>) attributes {dimension_semantics = [#tpu.dimension_semantics<parallel>], iteration_bounds = array<i64: 1>, scalar_prefetch = 0 : i64, scratch_operands = 0 : i64, tpu.core_type = #tpu.core_type<tc>, window_params = [{transform_indices = @transform_0, window_bounds = array<i64: 128, 48>}, {pipeline_mode = #tpu.pipeline_mode<synchronous>, transform_indices = @transform_1, window_bounds = array<i64: 48, 128>}, {pipeline_mode = #tpu.pipeline_mode<synchronous>, transform_indices = @transform_2, window_bounds = array<i64: 1, 128>}, {pipeline_mode = #tpu.pipeline_mode<synchronous>, transform_indices = @transform_3, window_bounds = array<i64: 128, 128>}, {pipeline_mode = #tpu.pipeline_mode<synchronous>, transform_indices = @transform_4, window_bounds = array<i64: 1, 128>}, {pipeline_mode = #tpu.pipeline_mode<synchronous>, transform_indices = @transform_5, window_bounds = array<i64: 1, 128>}, {transform_indices = @transform_6, window_bounds = array<i64: 1>}, {transform_indices = @transform_7, window_bounds = array<i64: 1, 128>}]} {
    %c0 = arith.constant 0 : index
    %c0_0 = arith.constant 0 : index
    %0 = vector.load %arg1[%c0, %c0_0] : memref<128x48xf32, #tpu.memory_space<vmem>>, vector<128x48xf32>
    %1 = arith.truncf %0 : vector<128x48xf32> to vector<128x48xbf16>
    %c0_1 = arith.constant 0 : index
    %c0_2 = arith.constant 0 : index
    %2 = vector.load %arg2[%c0_1, %c0_2] : memref<48x128xbf16, #tpu.memory_space<vmem>>, vector<48x128xbf16>
    %cst = arith.constant dense<0.000000e+00> : vector<128x128xf32>
    %3 = tpu.matmul %1, %2, %cst {dimension_numbers = #tpu.dot_dimension_numbers<[1], [0], [0], [1], [0, 0, 1, 1], [], []>} : vector<128x48xbf16>, vector<48x128xbf16>, vector<128x128xf32> -> vector<128x128xf32>
    %c0_3 = arith.constant 0 : index
    %c0_4 = arith.constant 0 : index
    %4 = vector.load %arg3[%c0_3, %c0_4] : memref<1x128xf32, #tpu.memory_space<vmem>>, vector<1x128xf32>
    %5 = vector.broadcast %4 : vector<1x128xf32> to vector<128x128xf32>
    %6 = arith.addf %3, %5 : vector<128x128xf32>
    %cst_5 = arith.constant 0.000000e+00 : f32
    %7 = vector.broadcast %cst_5 : f32 to vector<128x128xf32>
    %8 = arith.maximumf %6, %7 : vector<128x128xf32>
    %9 = arith.truncf %8 : vector<128x128xf32> to vector<128x128xbf16>
    %c0_6 = arith.constant 0 : index
    %c0_7 = arith.constant 0 : index
    %10 = vector.load %arg4[%c0_6, %c0_7] : memref<128x128xbf16, #tpu.memory_space<vmem>>, vector<128x128xbf16>
    %cst_8 = arith.constant dense<0.000000e+00> : vector<128x128xf32>
    %11 = tpu.matmul %9, %10, %cst_8 {dimension_numbers = #tpu.dot_dimension_numbers<[1], [0], [0], [1], [0, 0, 1, 1], [], []>} : vector<128x128xbf16>, vector<128x128xbf16>, vector<128x128xf32> -> vector<128x128xf32>
    %c0_9 = arith.constant 0 : index
    %c0_10 = arith.constant 0 : index
    %12 = vector.load %arg5[%c0_9, %c0_10] : memref<1x128xf32, #tpu.memory_space<vmem>>, vector<1x128xf32>
    %13 = vector.broadcast %12 : vector<1x128xf32> to vector<128x128xf32>
    %14 = arith.addf %11, %13 : vector<128x128xf32>
    %cst_11 = arith.constant 0.000000e+00 : f32
    %15 = vector.broadcast %cst_11 : f32 to vector<128x128xf32>
    %16 = arith.maximumf %14, %15 : vector<128x128xf32>
    %c0_12 = arith.constant 0 : index
    %c0_13 = arith.constant 0 : index
    %17 = vector.load %arg6[%c0_12, %c0_13] : memref<1x128xf32, #tpu.memory_space<vmem>>, vector<1x128xf32>
    %18 = vector.broadcast %17 : vector<1x128xf32> to vector<128x128xf32>
    %19 = arith.mulf %16, %18 : vector<128x128xf32>
    %20 = vector.shape_cast %19 : vector<128x128xf32> to vector<1x128x128xf32>
    %cst_14 = arith.constant dense<0.000000e+00> : vector<1x128xf32>
    %21 = vector.multi_reduction <add>, %20, %cst_14 [2] : vector<1x128x128xf32> to vector<1x128xf32>
    %c0_15 = arith.constant 0 : index
    %22 = memref.load %arg7[%c0_15] : memref<1xf32, #tpu.memory_space<smem>>
    %23 = vector.broadcast %22 : f32 to vector<1x128xf32>
    %24 = arith.addf %21, %23 : vector<1x128xf32>
    %25 = math.tanh %24 : vector<1x128xf32>
    %c0_16 = arith.constant 0 : index
    %c0_17 = arith.constant 0 : index
    %26 = vector.load %arg8[%c0_16, %c0_17] : memref<1x128xf32, #tpu.memory_space<vmem>>, vector<1x128xf32>
    tpu.vector_store %arg8[%c0_16, %c0_17], %25 {strides = array<i32>} : memref<1x128xf32, #tpu.memory_space<vmem>>, vector<1x128xf32>,
    return
  }
  func.func @transform_0(%arg0: i32) -> (i32, i32) {
    %c0_i32 = arith.constant 0 : i32
    %c0_i32_0 = arith.constant 0 : i32
    return %arg0, %c0_i32 : i32, i32
  }
  func.func @transform_1(%arg0: i32) -> (i32, i32) {
    %c0_i32 = arith.constant 0 : i32
    %c0_i32_0 = arith.constant 0 : i32
    %c0_i32_1 = arith.constant 0 : i32
    return %c0_i32, %c0_i32_0 : i32, i32
  }
  func.func @transform_2(%arg0: i32) -> (i32, i32) {
    %c0_i32 = arith.constant 0 : i32
    %c0_i32_0 = arith.constant 0 : i32
    %c0_i32_1 = arith.constant 0 : i32
    return %c0_i32, %c0_i32_0 : i32, i32
  }
  func.func @transform_3(%arg0: i32) -> (i32, i32) {
    %c0_i32 = arith.constant 0 : i32
    %c0_i32_0 = arith.constant 0 : i32
    %c0_i32_1 = arith.constant 0 : i32
    return %c0_i32, %c0_i32_0 : i32, i32
  }
  func.func @transform_4(%arg0: i32) -> (i32, i32) {
    %c0_i32 = arith.constant 0 : i32
    %c0_i32_0 = arith.constant 0 : i32
    %c0_i32_1 = arith.constant 0 : i32
    return %c0_i32, %c0_i32_0 : i32, i32
  }
  func.func @transform_5(%arg0: i32) -> (i32, i32) {
    %c0_i32 = arith.constant 0 : i32
    %c0_i32_0 = arith.constant 0 : i32
    %c0_i32_1 = arith.constant 0 : i32
    return %c0_i32, %c0_i32_0 : i32, i32
  }
  func.func @transform_6(%arg0: i32) -> i32 {
    %c0_i32 = arith.constant 0 : i32
    %c0_i32_0 = arith.constant 0 : i32
    return %c0_i32 : i32
  }
  func.func @transform_7(%arg0: i32) -> (i32, i32) {
    %c0_i32 = arith.constant 0 : i32
    %c0_i32_0 = arith.constant 0 : i32
    return %arg0, %c0_i32 : i32, i32
  }
}

</mosaic_0001>

<llo_original>
// kernel: tpu_custom_call.1
$region0: #{tpu_custom_call.1}
  #allocation0 [shape = 'u32[]', space=smem, size = 0x4, offset = 0x4, fixed_abs, tag = 'smem constant byte address 0x4 - core index']
  #allocation1 [shape = 'u32[72,128]{1,0:T(1,128)}', space=vmem, size = 0x9000, scoped, tag = 'internal scratch']
  #allocation2 [shape = 'f32[1]{0:T(128)S(6)}', space=smem, size = 0x200, scoped, tag = 'scoped memory for tpu_custom_call.1']
  %s0 = inlined_call_operand.vmem [shape: f32[128,48], index: 0, kind: input, shape index: {}]
  %s1 = inlined_call_operand.vmem [shape: bf16[48,128], index: 1, kind: input, shape index: {}]
  %s2 = inlined_call_operand.vmem [shape: f32[1,128], index: 2, kind: input, shape index: {}]
  %s3 = inlined_call_operand.vmem [shape: bf16[128,128], index: 3, kind: input, shape index: {}]
  %s4 = inlined_call_operand.vmem [shape: f32[1,128], index: 4, kind: input, shape index: {}]
  %s5 = inlined_call_operand.vmem [shape: f32[1,128], index: 5, kind: input, shape index: {}]
  %s6 = inlined_call_operand.<no memory space> [shape: f32[1], index: 6, kind: input, shape index: {}]
  %s7 = inlined_call_operand.hbm [shape: f32[1,128], index: 7, kind: output, shape index: {}]
  %s8 = sld [smem:[#allocation0]]
  $region38: #{tpu_custom_call.1} parent=0
    _
  %s10 = ssub.s32 1, %s8
  %s11 = scalar_select 0, %s10, %s8
  %12 = sst [smem:[#allocation2]] %s6
  $region1: #{tpu_custom_call.1} parent=0
    #allocation3 [shape = 'u8[512]{0}', space=vmem, size = 0x400, scoped, tag = 'output window, operand 0, single buffered']
    #allocation4 [shape = 's32[1]{0}', space=sflag, size = 0x4, scoped, tag = 'scoped memory for tpu_custom_call.1']
    %13 = vsyncpa [#allocation4], 0
    // Predicated region
    $region2: #{tpu_custom_call.1} parent=1 // pred_check
      _
    $region3: #{tpu_custom_call.1} parent=1 // pred_check_branch
      %15 = sbr.rel (0) target = $region5
    $region4: #{tpu_custom_call.1} parent=1 // pred_region
      _
    $region5: #{tpu_custom_call.1} parent=1 // pred_fallthru
      _
    // Predicated region
    $region6: #{tpu_custom_call.1} parent=1 // pred_check
      _
    $region7: #{tpu_custom_call.1} parent=1 // pred_check_branch
      %17 = sbr.rel (0) target = $region9
    $region8: #{tpu_custom_call.1} parent=1 // pred_region
      _
    $region9: #{tpu_custom_call.1} parent=1 // pred_fallthru
      _
    // Predicated region
    $region10: #{tpu_custom_call.1} parent=1 // pred_check
      _
    $region11: #{tpu_custom_call.1} parent=1 // pred_check_branch
      %19 = sbr.rel (0) target = $region13
    $region12: #{tpu_custom_call.1} parent=1 // pred_region
      _
    $region13: #{tpu_custom_call.1} parent=1 // pred_fallthru
      _
    // Predicated region
    $region14: #{tpu_custom_call.1} parent=1 // pred_check
      _
    $region15: #{tpu_custom_call.1} parent=1 // pred_check_branch
      %21 = sbr.rel (0) target = $region17
    $region16: #{tpu_custom_call.1} parent=1 // pred_region
      _
    $region17: #{tpu_custom_call.1} parent=1 // pred_fallthru
      _
    // Predicated region
    $region18: #{tpu_custom_call.1} parent=1 // pred_check
      _
    $region19: #{tpu_custom_call.1} parent=1 // pred_check_branch
      %23 = sbr.rel (0) target = $region21
    $region20: #{tpu_custom_call.1} parent=1 // pred_region
      _
    $region21: #{tpu_custom_call.1} parent=1 // pred_fallthru
      _
    // Predicated region
    $region22: #{tpu_custom_call.1} parent=1 // pred_check
      _
    $region23: #{tpu_custom_call.1} parent=1 // pred_check_branch
      %25 = sbr.rel (0) target = $region25
    $region24: #{tpu_custom_call.1} parent=1 // pred_region
      _
    $region25: #{tpu_custom_call.1} parent=1 // pred_fallthru
      _
    // Predicated region
    $region26: #{tpu_custom_call.1} parent=1 // pred_check
      _
    $region27: #{tpu_custom_call.1} parent=1 // pred_check_branch
      %27 = sbr.rel (0) target = $region29
    $region28: #{tpu_custom_call.1} parent=1 // pred_region
      _
    $region29: #{tpu_custom_call.1} parent=1 // pred_fallthru
      _
    %v29 = vld [vmem:[%s0] sm:$0xff]
    %v30 = vld [vmem:[%s0 + $0x8] sm:$0xff]
    %v31 = vld [vmem:[%s0 + $0x10] sm:$0xff]
    %v32 = vld [vmem:[%s0 + $0x18] sm:$0xff]
    %v33 = vld [vmem:[%s0 + $0x20] sm:$0xff]
    %v34 = vld [vmem:[%s0 + $0x28] sm:$0xff]
    %v35 = vld [vmem:[%s0 + $0x30] sm:$0xff]
    %v36 = vld [vmem:[%s0 + $0x38] sm:$0xff]
    %v37 = vld [vmem:[%s0 + $0x40] sm:$0xff]
    %v38 = vld [vmem:[%s0 + $0x48] sm:$0xff]
    %v39 = vld [vmem:[%s0 + $0x50] sm:$0xff]
    %v40 = vld [vmem:[%s0 + $0x58] sm:$0xff]
    %v41 = vld [vmem:[%s0 + $0x60] sm:$0xff]
    %v42 = vld [vmem:[%s0 + $0x68] sm:$0xff]
    %v43 = vld [vmem:[%s0 + $0x70] sm:$0xff]
    %v44 = vld [vmem:[%s0 + $0x78] sm:$0xff]
    %v45 = vpack.c.bf16 %v30, %v29
    %v46 = vpack.c.bf16 %v32, %v31
    %v47 = vpack.c.bf16 %v34, %v33
    %v48 = vpack.c.bf16 %v36, %v35
    %v49 = vpack.c.bf16 %v38, %v37
    %v50 = vpack.c.bf16 %v40, %v39
    %v51 = vpack.c.bf16 %v42, %v41
    %v52 = vpack.c.bf16 %v44, %v43
    %v53 = vld [vmem:[%s1] sm:$0xf]
    %v54 = vld [vmem:[%s1 + $0x4] sm:$0xf]
    %v55 = vld [vmem:[%s1 + $0x8] sm:$0xf]
    %v56 = vld [vmem:[%s1 + $0xc] sm:$0xf]
    %v57 = vld [vmem:[%s1 + $0x10] sm:$0xf]
    %v58 = vld [vmem:[%s1 + $0x14] sm:$0xf]
    %v59 = vld [vmem:[%s2] sm:$0x1]
    %v61 = vperm.slane %v59, 0
    %v69 = vunpack.c.l.b16 %v53
    %v70 = vunpack.c.l.b16 %v54
    %v71 = vunpack.c.l.b16 %v55
    %v72 = vunpack.c.l.b16 %v56
    %v73 = vunpack.c.l.b16 %v57
    %v74 = vunpack.c.l.b16 %v58
    %v75 = vpack.c.b16 %v70, %v69
    %v76 = vpack.c.b16 %v72, %v71
    %v77 = vpack.c.b16 %v74, %v73
    %vm81 = vcmask 392192
    %v83 = vsel %vm81, %v45, 0
    %v86 = vsel %vm81, %v46, 0
    %v89 = vsel %vm81, %v47, 0
    %v92 = vsel %vm81, %v48, 0
    %v95 = vsel %vm81, %v49, 0
    %v98 = vsel %vm81, %v50, 0
    %v101 = vsel %vm81, %v51, 0
    %v104 = vsel %vm81, %v52, 0
    %106 = vmatpush.bf16.msra.mxu0 0
    %107 = vmatpush.bf16.msra.mxu0 0
    %108 = vmatpush.bf16.msra.mxu0 0
    %109 = vmatpush.bf16.msra.mxu0 0
    %110 = vmatpush.bf16.msra.mxu0 0
    %111 = vmatpush.bf16.msra.mxu0 %v77
    %112 = vmatpush.bf16.msra.mxu0 %v76
    %113 = vmatpush.bf16.msra.mxu0 %v75
    %114 = vmatmul.bf16.gmra.mxu0 %v83
    %v115 = vpop.f32.mrf.mxu0
    %v116 = vadd.f32 %v61, %v115
    %v117 = vpop.f32.mrf.mxu0
    %v118 = vadd.f32 %v61, %v117
    %119 = vmatmul.bf16.gmra.mxu0 %v86
    %v120 = vpop.f32.mrf.mxu0
    %v121 = vadd.f32 %v61, %v120
    %v122 = vpop.f32.mrf.mxu0
    %v123 = vadd.f32 %v61, %v122
    %124 = vmatmul.bf16.gmra.mxu0 %v89
    %v125 = vpop.f32.mrf.mxu0
    %v126 = vadd.f32 %v61, %v125
    %v127 = vpop.f32.mrf.mxu0
    %v128 = vadd.f32 %v61, %v127
    %129 = vmatmul.bf16.gmra.mxu0 %v92
    %v130 = vpop.f32.mrf.mxu0
    %v131 = vadd.f32 %v61, %v130
    %v132 = vpop.f32.mrf.mxu0
    %v133 = vadd.f32 %v61, %v132
    %134 = vmatmul.bf16.gmra.mxu0 %v95
    %v135 = vpop.f32.mrf.mxu0
    %v136 = vadd.f32 %v61, %v135
    %v137 = vpop.f32.mrf.mxu0
    %v138 = vadd.f32 %v61, %v137
    %139 = vmatmul.bf16.gmra.mxu0 %v98
    %v140 = vpop.f32.mrf.mxu0
    %v141 = vadd.f32 %v61, %v140
    %v142 = vpop.f32.mrf.mxu0
    %v143 = vadd.f32 %v61, %v142
    %144 = vmatmul.bf16.gmra.mxu0 %v101
    %v145 = vpop.f32.mrf.mxu0
    %v146 = vadd.f32 %v61, %v145
    %v147 = vpop.f32.mrf.mxu0
    %v148 = vadd.f32 %v61, %v147
    %149 = vmatmul.bf16.gmra.mxu0 %v104
    %v150 = vpop.f32.mrf.mxu0
    %v151 = vadd.f32 %v61, %v150
    %v152 = vpop.f32.mrf.mxu0
    %v153 = vadd.f32 %v61, %v152
    %154 = vdwg.mxu0
    %v155 = vmax.f32 %v116, 0.0
    %v156 = vmax.f32 %v118, 0.0
    %v157 = vmax.f32 %v121, 0.0
    %v158 = vmax.f32 %v123, 0.0
    %v159 = vmax.f32 %v126, 0.0
    %v160 = vmax.f32 %v128, 0.0
    %v161 = vmax.f32 %v131, 0.0
    %v162 = vmax.f32 %v133, 0.0
    %v163 = vmax.f32 %v136, 0.0
    %v164 = vmax.f32 %v138, 0.0
    %v165 = vmax.f32 %v141, 0.0
    %v166 = vmax.f32 %v143, 0.0
    %v167 = vmax.f32 %v146, 0.0
    %v168 = vmax.f32 %v148, 0.0
    %v169 = vmax.f32 %v151, 0.0
    %v170 = vmax.f32 %v153, 0.0
    %v171 = vpack.c.bf16 %v156, %v155
    %v172 = vpack.c.bf16 %v158, %v157
    %v173 = vpack.c.bf16 %v160, %v159
    %v174 = vpack.c.bf16 %v162, %v161
    %v175 = vpack.c.bf16 %v164, %v163
    %v176 = vpack.c.bf16 %v166, %v165
    %v177 = vpack.c.bf16 %v168, %v167
    %v178 = vpack.c.bf16 %v170, %v169
    %v179 = vld [vmem:[%s3] sm:$0xf]
    %v180 = vld [vmem:[%s3 + $0x4] sm:$0xf]
    %v181 = vld [vmem:[%s3 + $0x8] sm:$0xf]
    %v182 = vld [vmem:[%s3 + $0xc] sm:$0xf]
    %v183 = vld [vmem:[%s3 + $0x10] sm:$0xf]
    %v184 = vld [vmem:[%s3 + $0x14] sm:$0xf]
    %v185 = vld [vmem:[%s3 + $0x18] sm:$0xf]
    %v186 = vld [vmem:[%s3 + $0x1c] sm:$0xf]
    %v187 = vld [vmem:[%s3 + $0x20] sm:$0xf]
    %v188 = vld [vmem:[%s3 + $0x24] sm:$0xf]
    %v189 = vld [vmem:[%s3 + $0x28] sm:$0xf]
    %v190 = vld [vmem:[%s3 + $0x2c] sm:$0xf]
    %v191 = vld [vmem:[%s3 + $0x30] sm:$0xf]
    %v192 = vld [vmem:[%s3 + $0x34] sm:$0xf]
    %v193 = vld [vmem:[%s3 + $0x38] sm:$0xf]
    %v194 = vld [vmem:[%s3 + $0x3c] sm:$0xf]
    %v195 = vld [vmem:[%s4] sm:$0x1]
    %v197 = vperm.slane %v195, 0
    %v215 = vunpack.c.l.b16 %v179
    %v216 = vunpack.c.l.b16 %v180
    %v217 = vunpack.c.l.b16 %v181
    %v218 = vunpack.c.l.b16 %v182
    %v219 = vunpack.c.l.b16 %v183
    %v220 = vunpack.c.l.b16 %v184
    %v221 = vunpack.c.l.b16 %v185
    %v222 = vunpack.c.l.b16 %v186
    %v223 = vunpack.c.l.b16 %v187
    %v224 = vunpack.c.l.b16 %v188
    %v225 = vunpack.c.l.b16 %v189
    %v226 = vunpack.c.l.b16 %v190
    %v227 = vunpack.c.l.b16 %v191
    %v228 = vunpack.c.l.b16 %v192
    %v229 = vunpack.c.l.b16 %v193
    %v230 = vunpack.c.l.b16 %v194
    %v231 = vpack.c.b16 %v216, %v215
    %v232 = vpack.c.b16 %v218, %v217
    %v233 = vpack.c.b16 %v220, %v219
    %v234 = vpack.c.b16 %v222, %v221
    %v235 = vpack.c.b16 %v224, %v223
    %v236 = vpack.c.b16 %v226, %v225
    %v237 = vpack.c.b16 %v228, %v227
    %v238 = vpack.c.b16 %v230, %v229
    %247 = vmatpush.bf16.msra.mxu0 %v238
    %248 = vmatpush.bf16.msra.mxu0 %v237
    %249 = vmatpush.bf16.msra.mxu0 %v236
    %250 = vmatpush.bf16.msra.mxu0 %v235
    %251 = vmatpush.bf16.msra.mxu0 %v234
    %252 = vmatpush.bf16.msra.mxu0 %v233
    %253 = vmatpush.bf16.msra.mxu0 %v232
    %254 = vmatpush.bf16.msra.mxu0 %v231
    %255 = vmatmul.bf16.gmra.mxu0 %v171
    %v256 = vpop.f32.mrf.mxu0
    %v257 = vadd.f32 %v197, %v256
    %v258 = vpop.f32.mrf.mxu0
    %v259 = vadd.f32 %v197, %v258
    %260 = vmatmul.bf16.gmra.mxu0 %v172
    %v261 = vpop.f32.mrf.mxu0
    %v262 = vadd.f32 %v197, %v261
    %v263 = vpop.f32.mrf.mxu0
    %v264 = vadd.f32 %v197, %v263
    %265 = vmatmul.bf16.gmra.mxu0 %v173
    %v266 = vpop.f32.mrf.mxu0
    %v267 = vadd.f32 %v197, %v266
    %v268 = vpop.f32.mrf.mxu0
    %v269 = vadd.f32 %v197, %v268
    %270 = vmatmul.bf16.gmra.mxu0 %v174
    %v271 = vpop.f32.mrf.mxu0
    %v272 = vadd.f32 %v197, %v271
    %v273 = vpop.f32.mrf.mxu0
    %v274 = vadd.f32 %v197, %v273
    %275 = vmatmul.bf16.gmra.mxu0 %v175
    %v276 = vpop.f32.mrf.mxu0
    %v277 = vadd.f32 %v197, %v276
    %v278 = vpop.f32.mrf.mxu0
    %v279 = vadd.f32 %v197, %v278
    %280 = vmatmul.bf16.gmra.mxu0 %v176
    %v281 = vpop.f32.mrf.mxu0
    %v282 = vadd.f32 %v197, %v281
    %v283 = vpop.f32.mrf.mxu0
    %v284 = vadd.f32 %v197, %v283
    %285 = vmatmul.bf16.gmra.mxu0 %v177
    %v286 = vpop.f32.mrf.mxu0
    %v287 = vadd.f32 %v197, %v286
    %v288 = vpop.f32.mrf.mxu0
    %v289 = vadd.f32 %v197, %v288
    %290 = vmatmul.bf16.gmra.mxu0 %v178
    %v291 = vpop.f32.mrf.mxu0
    %v292 = vadd.f32 %v197, %v291
    %v293 = vpop.f32.mrf.mxu0
    %v294 = vadd.f32 %v197, %v293
    %295 = vdwg.mxu0
    %v296 = vmax.f32 %v257, 0.0
    %v297 = vmax.f32 %v259, 0.0
    %v298 = vmax.f32 %v262, 0.0
    %v299 = vmax.f32 %v264, 0.0
    %v300 = vmax.f32 %v267, 0.0
    %v301 = vmax.f32 %v269, 0.0
    %v302 = vmax.f32 %v272, 0.0
    %v303 = vmax.f32 %v274, 0.0
    %v304 = vmax.f32 %v277, 0.0
    %v305 = vmax.f32 %v279, 0.0
    %v306 = vmax.f32 %v282, 0.0
    %v307 = vmax.f32 %v284, 0.0
    %v308 = vmax.f32 %v287, 0.0
    %v309 = vmax.f32 %v289, 0.0
    %v310 = vmax.f32 %v292, 0.0
    %v311 = vmax.f32 %v294, 0.0
    %v312 = vld [vmem:[%s5] sm:$0x1]
    %v314 = vperm.slane %v312, 0
    %v316 = vmul.f32 %v296, %v314
    %v317 = vmul.f32 %v297, %v314
    %v318 = vmul.f32 %v298, %v314
    %v319 = vmul.f32 %v299, %v314
    %v320 = vmul.f32 %v300, %v314
    %v321 = vmul.f32 %v301, %v314
    %v322 = vmul.f32 %v302, %v314
    %v323 = vmul.f32 %v303, %v314
    %v324 = vmul.f32 %v304, %v314
    %v325 = vmul.f32 %v305, %v314
    %v326 = vmul.f32 %v306, %v314
    %v327 = vmul.f32 %v307, %v314
    %v328 = vmul.f32 %v308, %v314
    %v329 = vmul.f32 %v309, %v314
    %v330 = vmul.f32 %v310, %v314
    %v331 = vmul.f32 %v311, %v314
    %332 = vadd.xlane.f32.xlu0 %v316
    %v333 = vpop.xlane.xlu0 %332
    %334 = vadd.xlane.f32.xlu0 %v317
    %v335 = vpop.xlane.xlu0 %334
    %336 = vadd.xlane.f32.xlu0 %v318
    %v337 = vpop.xlane.xlu0 %336
    %338 = vadd.xlane.f32.xlu0 %v319
    %v339 = vpop.xlane.xlu0 %338
    %340 = vadd.xlane.f32.xlu0 %v320
    %v341 = vpop.xlane.xlu0 %340
    %342 = vadd.xlane.f32.xlu0 %v321
    %v343 = vpop.xlane.xlu0 %342
    %344 = vadd.xlane.f32.xlu0 %v322
    %v345 = vpop.xlane.xlu0 %344
    %346 = vadd.xlane.f32.xlu0 %v323
    %v347 = vpop.xlane.xlu0 %346
    %348 = vadd.xlane.f32.xlu0 %v324
    %v349 = vpop.xlane.xlu0 %348
    %350 = vadd.xlane.f32.xlu0 %v325
    %v351 = vpop.xlane.xlu0 %350
    %352 = vadd.xlane.f32.xlu0 %v326
    %v353 = vpop.xlane.xlu0 %352
    %354 = vadd.xlane.f32.xlu0 %v327
    %v355 = vpop.xlane.xlu0 %354
    %356 = vadd.xlane.f32.xlu0 %v328
    %v357 = vpop.xlane.xlu0 %356
    %358 = vadd.xlane.f32.xlu0 %v329
    %v359 = vpop.xlane.xlu0 %358
    %360 = vadd.xlane.f32.xlu0 %v330
    %v361 = vpop.xlane.xlu0 %360
    %362 = vadd.xlane.f32.xlu0 %v331
    %v363 = vpop.xlane.xlu0 %362
    %s364 = sld [smem:[#allocation2]]
    %v365 = vstv %s364
    %v366 = vadd.f32 %v333, %v365
    %v367 = vadd.f32 %v335, %v365
    %v368 = vadd.f32 %v337, %v365
    %v369 = vadd.f32 %v339, %v365
    %v370 = vadd.f32 %v341, %v365
    %v371 = vadd.f32 %v343, %v365
    %v372 = vadd.f32 %v345, %v365
    %v373 = vadd.f32 %v347, %v365
    %v374 = vadd.f32 %v349, %v365
    %v375 = vadd.f32 %v351, %v365
    %v376 = vadd.f32 %v353, %v365
    %v377 = vadd.f32 %v355, %v365
    %v378 = vadd.f32 %v357, %v365
    %v379 = vadd.f32 %v359, %v365
    %v380 = vadd.f32 %v361, %v365
    %v381 = vadd.f32 %v363, %v365
    %v382 = vtanh.pop %v366
    %v383 = vtanh.pop %v367
    %v384 = vtanh.pop %v368
    %v385 = vtanh.pop %v369
    %v386 = vtanh.pop %v370
    %v387 = vtanh.pop %v371
    %v388 = vtanh.pop %v372
    %v389 = vtanh.pop %v373
    %v390 = vtanh.pop %v374
    %v391 = vtanh.pop %v375
    %v392 = vtanh.pop %v376
    %v393 = vtanh.pop %v377
    %v394 = vtanh.pop %v378
    %v395 = vtanh.pop %v379
    %v396 = vtanh.pop %v380
    %v397 = vtanh.pop %v381
    %v414 = vlaneseq
    %v415 = vand.u32 %v414, 127
    %v416 = vperm.slane %v382, %v415
    %v417 = vadd.s32 %v415, 4294967288
    %v418 = vperm.slane %v383, %v417
    %vm419 = vcmask 130112
    %v420 = vsel %vm419, %v418, %v416
    %v421 = vadd.s32 %v415, 4294967280
    %v422 = vperm.slane %v384, %v421
    %vm423 = vcmask 195712
    %v424 = vsel %vm423, %v422, %v420
    %v425 = vadd.s32 %v415, 4294967272
    %v426 = vperm.slane %v385, %v425
    %vm427 = vcmask 261312
    %v428 = vsel %vm427, %v426, %v424
    %v429 = vadd.s32 %v415, 4294967264
    %v430 = vperm.slane %v386, %v429
    %vm431 = vcmask 326912
    %v432 = vsel %vm431, %v430, %v428
    %v433 = vadd.s32 %v415, 4294967256
    %v434 = vperm.slane %v387, %v433
    %vm435 = vcmask 392512
    %v436 = vsel %vm435, %v434, %v432
    %v437 = vadd.s32 %v415, 4294967248
    %v438 = vperm.slane %v388, %v437
    %vm439 = vcmask 458112
    %v440 = vsel %vm439, %v438, %v436
    %v441 = vadd.s32 %v415, 4294967240
    %v442 = vperm.slane %v389, %v441
    %vm443 = vcmask 523712
    %v444 = vsel %vm443, %v442, %v440
    %v445 = vadd.s32 %v415, 4294967232
    %v446 = vperm.slane %v390, %v445
    %vm447 = vcmask 589312
    %v448 = vsel %vm447, %v446, %v444
    %v449 = vadd.s32 %v415, 4294967224
    %v450 = vperm.slane %v391, %v449
    %vm451 = vcmask 654912
    %v452 = vsel %vm451, %v450, %v448
    %v453 = vadd.s32 %v415, 4294967216
    %v454 = vperm.slane %v392, %v453
    %vm455 = vcmask 720512
    %v456 = vsel %vm455, %v454, %v452
    %v457 = vadd.s32 %v415, 4294967208
    %v458 = vperm.slane %v393, %v457
    %vm459 = vcmask 786112
    %v460 = vsel %vm459, %v458, %v456
    %v461 = vadd.s32 %v415, 4294967200
    %v462 = vperm.slane %v394, %v461
    %vm463 = vcmask 851712
    %v464 = vsel %vm463, %v462, %v460
    %v465 = vadd.s32 %v415, 4294967192
    %v466 = vperm.slane %v395, %v465
    %vm467 = vcmask 917312
    %v468 = vsel %vm467, %v466, %v464
    %v469 = vadd.s32 %v415, 4294967184
    %v470 = vperm.slane %v396, %v469
    %vm471 = vcmask 982912
    %v472 = vsel %vm471, %v470, %v468
    %v473 = vadd.s32 %v415, 4294967176
    %v474 = vperm.slane %v397, %v473
    %vm475 = vcmask 1048512
    %v476 = vsel %vm475, %v474, %v472
    %478 = vst [vmem:[#allocation3] sm:$0x1] %v476
    // Predicated region
    $region30: #{tpu_custom_call.1} parent=1 // pred_check
      _
    $region31: #{tpu_custom_call.1} parent=1 // pred_check_branch
      %480 = sbr.rel (0) target = $region33
    $region32: #{tpu_custom_call.1} parent=1 // pred_region
      %482 = vsyncadd [#allocation4], 0
      %s484 = sshll.u32 [#allocation3], 4
      %s485 = int_to_ptr.vmem [resolvable:$true] %s484
      %s486 = sshll.u32 %s7, 4
      %s487 = int_to_ptr.hbm [resolvable:$true] %s486
      %489 = dma.vmem_to_hbm [thread:$0]  %s485, 16, %s487, [#allocation4]
    $region33: #{tpu_custom_call.1} parent=1 // pred_fallthru
      _
    // Predicated region
    $region34: #{tpu_custom_call.1} parent=1 // pred_check
      _
    $region35: #{tpu_custom_call.1} parent=1 // pred_check_branch
      %491 = sbr.rel (0) target = $region37
    $region36: #{tpu_custom_call.1} parent=1 // pred_region
      %493 = dma.done [#allocation4], 16
    $region37: #{tpu_custom_call.1} parent=1 // pred_fallthru
      _
    %494 = vsyncpa [#allocation4], 1

</llo_original>
